<compile_context>
chip_gen: v7x
topology: tpu7x:2x2x1
jax: 0.10.0
libtpu: 0.0.40
codegen_flags: <defaults>
</compile_context>

<pallas_src>
import jax
import jax.numpy as jnp
from jax import lax
from jax.experimental import pallas as pl
from jax.experimental.pallas import tpu as pltpu


_LANES = 128
_SUBLANES = 8
_SLAB_COLS = _SUBLANES * _LANES          # 1024 lanes: unmasked full-width stores
_MAX_ROWS_PER_TILE = 1024                # 1024x1024 f32 tile = 4 MiB (x2 buffers = 8 MiB)

_KEEP_P = 0.7                            # dropout p = 0.3
_U24_TO_UNIT = 1.0 / float(1 << 24)
_DROP_THRESHOLD_24 = int(round(0.3 * (1 << 24)))   # P(bits24 >= thr) ~= 0.7


def _mix32(x):
    """lowbias32 integer finalizer (Wellons): uint32 -> well-mixed uint32."""
    x = x ^ (x >> 16)
    x = x * jnp.uint32(0x7FEB352D)
    x = x ^ (x >> 15)
    x = x * jnp.uint32(0x846CA68B)
    x = x ^ (x >> 16)
    return x


def _rand_dropout_kernel(seed_ref, o_ref):
    """o = dropout(uniform[0,1), p=0.3) from a counter-based in-kernel RNG.

    seed_ref: (1, 1) int32 (VMEM)
    o_ref   : (rows_tile, _SLAB_COLS) output tile
    """
    rows_tile, cols = o_ref.shape

    # Globally unique element index -> independent randoms per grid step / core.
    row = lax.broadcasted_iota(jnp.int32, (rows_tile, cols), 0)
    row = row + pl.program_id(0) * rows_tile
    col = lax.broadcasted_iota(jnp.int32, (rows_tile, cols), 1)
    idx = (row * cols + col).astype(jnp.uint32)

    seed = seed_ref[...].astype(jnp.uint32)              # (1, 1), broadcasts
    base = (idx * jnp.uint32(2)
            + seed * jnp.uint32(0x9E3779B9)
            + jnp.uint32(0x6A09E667))

    r_bits = _mix32(base)                   # stream 0: uniform value bits
    m_bits = _mix32(base + jnp.uint32(1))   # stream 1: dropout mask bits

    # torch.rand_like -> uniform [0, 1); dropout's 1/0.7 rescale is folded
    # into the conversion constant (one fewer vmul per element).
    rand_scaled = (r_bits >> 8).astype(jnp.float32) * jnp.float32(
        _U24_TO_UNIT / _KEEP_P)

    # Keep test directly on integer bits (no float convert / compare chain).
    keep = (m_bits >> 8) >= jnp.uint32(_DROP_THRESHOLD_24)

    out = jnp.where(keep, rand_scaled, jnp.float32(0.0))
    o_ref[...] = out.astype(o_ref.dtype)


def model_forward(x, seed: int = 0):
    """Pallas equivalent of Model().forward(x); x is (N, C, L)."""
    # TODO(synk): `F.dropout(x, p=0.5)` and `t = F.conv1d(x, x)` in the
    # reference are dead code (t unused, x overwritten by rand_like); skipped.
    total = int(x.size)
    padded = -(-total // _SLAB_COLS) * _SLAB_COLS
    rows = padded // _SLAB_COLS
    rows_tile = min(rows, _MAX_ROWS_PER_TILE)
    num_tiles = -(-rows // rows_tile)

    seed_arr = jnp.array([[seed]], dtype=jnp.int32)

    out2 = pl.pallas_call(
        _rand_dropout_kernel,
        out_shape=jax.ShapeDtypeStruct((rows, _SLAB_COLS), x.dtype),
        grid=(num_tiles,),
        in_specs=[pl.BlockSpec((1, 1), lambda i: (0, 0))],
        out_specs=pl.BlockSpec((rows_tile, _SLAB_COLS), lambda i: (i, 0)),
        compiler_params=pltpu.CompilerParams(
            dimension_semantics=("parallel",)),
    )(seed_arr)

    return out2.reshape(-1)[:total].reshape(x.shape)


if __name__ == "__main__":
    key = jax.random.PRNGKey(0)
    # Small (N, C, L) consistent with conv1d's 3-D input; L deliberately not a
    # multiple of 128 to exercise the lane-dense flatten/pad path.
    x = jax.random.uniform(key, (2, 4, 96), dtype=jnp.float32)

    out = model_forward(x, seed=0)
    out = jax.block_until_ready(out)

    # Sanity: shape/dtype preserved; values in [0, 1/0.7); ~30% zeros.
    assert out.shape == x.shape and out.dtype == x.dtype
    assert float(jnp.min(out)) >= 0.0
    assert float(jnp.max(out)) <= 1.0 / 0.7 + 1e-6
    zero_frac = float(jnp.mean(out == 0.0))
    assert 0.05 < zero_frac < 0.6, zero_frac

    print("KERNEL_OK")
</pallas_src>

<mosaic_0001>
module attributes {stable_mosaic.version = 11 : i64} {
  func.func @_rand_dropout_kernel(%arg0: i32, %arg1: memref<1x1xi32, #tpu.memory_space<vmem>>, %arg2: memref<1x1024xf32, #tpu.memory_space<vmem>>) attributes {dimension_semantics = [#tpu.dimension_semantics<parallel>], iteration_bounds = array<i64: 1>, scalar_prefetch = 0 : i64, scratch_operands = 0 : i64, tpu.core_type = #tpu.core_type<tc>, window_params = [{pipeline_mode = #tpu.pipeline_mode<synchronous>, transform_indices = @transform_0, window_bounds = array<i64: 1, 1>}, {transform_indices = @transform_1, window_bounds = array<i64: 1, 1024>}]} {
    %0 = tpu.iota {dimensions = array<i32: 0>} : vector<1x1024xi32>
    %c1_i32 = arith.constant 1 : i32
    %1 = arith.muli %arg0, %c1_i32 : i32
    %2 = vector.broadcast %1 : i32 to vector<1x1024xi32>
    %3 = arith.addi %0, %2 : vector<1x1024xi32>
    %4 = tpu.iota {dimensions = array<i32: 1>} : vector<1x1024xi32>
    %c1024_i32 = arith.constant 1024 : i32
    %5 = vector.broadcast %c1024_i32 : i32 to vector<1x1024xi32>
    %6 = arith.muli %3, %5 : vector<1x1024xi32>
    %7 = arith.addi %6, %4 : vector<1x1024xi32>
    %c0 = arith.constant 0 : index
    %c0_0 = arith.constant 0 : index
    %8 = vector.load %arg1[%c0, %c0_0] : memref<1x1xi32, #tpu.memory_space<vmem>>, vector<1x1xi32>
    %c2_i32 = arith.constant 2 : i32
    %9 = vector.broadcast %c2_i32 : i32 to vector<1x1024xi32>
    %10 = arith.muli %7, %9 : vector<1x1024xi32>
    %c-1640531527_i32 = arith.constant -1640531527 : i32
    %11 = vector.broadcast %c-1640531527_i32 : i32 to vector<1x1xi32>
    %12 = arith.muli %8, %11 : vector<1x1xi32>
    %13 = vector.broadcast %12 : vector<1x1xi32> to vector<1x1024xi32>
    %14 = arith.addi %10, %13 : vector<1x1024xi32>
    %c1779033703_i32 = arith.constant 1779033703 : i32
    %15 = vector.broadcast %c1779033703_i32 : i32 to vector<1x1024xi32>
    %16 = arith.addi %14, %15 : vector<1x1024xi32>
    %c16_i32 = arith.constant 16 : i32
    %17 = vector.broadcast %c16_i32 : i32 to vector<1x1024xi32>
    %18 = arith.shrui %16, %17 : vector<1x1024xi32>
    %19 = arith.xori %16, %18 : vector<1x1024xi32>
    %c2146121005_i32 = arith.constant 2146121005 : i32
    %20 = vector.broadcast %c2146121005_i32 : i32 to vector<1x1024xi32>
    %21 = arith.muli %19, %20 : vector<1x1024xi32>
    %c15_i32 = arith.constant 15 : i32
    %22 = vector.broadcast %c15_i32 : i32 to vector<1x1024xi32>
    %23 = arith.shrui %21, %22 : vector<1x1024xi32>
    %24 = arith.xori %21, %23 : vector<1x1024xi32>
    %c-2073254261_i32 = arith.constant -2073254261 : i32
    %25 = vector.broadcast %c-2073254261_i32 : i32 to vector<1x1024xi32>
    %26 = arith.muli %24, %25 : vector<1x1024xi32>
    %c16_i32_1 = arith.constant 16 : i32
    %27 = vector.broadcast %c16_i32_1 : i32 to vector<1x1024xi32>
    %28 = arith.shrui %26, %27 : vector<1x1024xi32>
    %29 = arith.xori %26, %28 : vector<1x1024xi32>
    %c1_i32_2 = arith.constant 1 : i32
    %30 = vector.broadcast %c1_i32_2 : i32 to vector<1x1024xi32>
    %31 = arith.addi %16, %30 : vector<1x1024xi32>
    %c16_i32_3 = arith.constant 16 : i32
    %32 = vector.broadcast %c16_i32_3 : i32 to vector<1x1024xi32>
    %33 = arith.shrui %31, %32 : vector<1x1024xi32>
    %34 = arith.xori %31, %33 : vector<1x1024xi32>
    %c2146121005_i32_4 = arith.constant 2146121005 : i32
    %35 = vector.broadcast %c2146121005_i32_4 : i32 to vector<1x1024xi32>
    %36 = arith.muli %34, %35 : vector<1x1024xi32>
    %c15_i32_5 = arith.constant 15 : i32
    %37 = vector.broadcast %c15_i32_5 : i32 to vector<1x1024xi32>
    %38 = arith.shrui %36, %37 : vector<1x1024xi32>
    %39 = arith.xori %36, %38 : vector<1x1024xi32>
    %c-2073254261_i32_6 = arith.constant -2073254261 : i32
    %40 = vector.broadcast %c-2073254261_i32_6 : i32 to vector<1x1024xi32>
    %41 = arith.muli %39, %40 : vector<1x1024xi32>
    %c16_i32_7 = arith.constant 16 : i32
    %42 = vector.broadcast %c16_i32_7 : i32 to vector<1x1024xi32>
    %43 = arith.shrui %41, %42 : vector<1x1024xi32>
    %44 = arith.xori %41, %43 : vector<1x1024xi32>
    %c8_i32 = arith.constant 8 : i32
    %45 = vector.broadcast %c8_i32 : i32 to vector<1x1024xi32>
    %46 = arith.shrui %29, %45 : vector<1x1024xi32>
    %47 = arith.uitofp %46 : vector<1x1024xi32> to vector<1x1024xf32>
    %cst = arith.constant 8.51494945E-8 : f32
    %48 = vector.broadcast %cst : f32 to vector<1x1024xf32>
    %49 = arith.mulf %47, %48 : vector<1x1024xf32>
    %c8_i32_8 = arith.constant 8 : i32
    %50 = vector.broadcast %c8_i32_8 : i32 to vector<1x1024xi32>
    %51 = arith.shrui %44, %50 : vector<1x1024xi32>
    %c5033165_i32 = arith.constant 5033165 : i32
    %52 = vector.broadcast %c5033165_i32 : i32 to vector<1x1024xi32>
    %53 = arith.cmpi uge, %51, %52 : vector<1x1024xi32>
    %cst_9 = arith.constant 0.000000e+00 : f32
    %54 = vector.broadcast %cst_9 : f32 to vector<1x1024xf32>
    %55 = arith.select %53, %49, %54 : vector<1x1024xi1>, vector<1x1024xf32>
    %c0_10 = arith.constant 0 : index
    %c0_11 = arith.constant 0 : index
    %56 = vector.load %arg2[%c0_10, %c0_11] : memref<1x1024xf32, #tpu.memory_space<vmem>>, vector<1x1024xf32>
    tpu.vector_store %arg2[%c0_10, %c0_11], %55 {strides = array<i32>} : memref<1x1024xf32, #tpu.memory_space<vmem>>, vector<1x1024xf32>,
    return
  }
  func.func @transform_0(%arg0: i32) -> (i32, i32) {
    %c0_i32 = arith.constant 0 : i32
    %c0_i32_0 = arith.constant 0 : i32
    %c0_i32_1 = arith.constant 0 : i32
    return %c0_i32, %c0_i32_0 : i32, i32
  }
  func.func @transform_1(%arg0: i32) -> (i32, i32) {
    %c0_i32 = arith.constant 0 : i32
    %c0_i32_0 = arith.constant 0 : i32
    return %arg0, %c0_i32 : i32, i32
  }
}

</mosaic_0001>

<llo_original>
// kernel: tpu_custom_call.1
$region0: #{tpu_custom_call.1}
  #allocation0 [shape = 'u32[]', space=smem, size = 0x4, offset = 0x4, fixed_abs, tag = 'smem constant byte address 0x4 - core index']
  #allocation1 [shape = 'u32[144,128]{1,0:T(1,128)}', space=vmem, size = 0x12000, scoped, tag = 'internal scratch']
  #allocation2 [shape = 's32[1,1]{1,0:T(1,128)S(1)}', space=vmem, size = 0x200, scoped, tag = 'scoped memory for tpu_custom_call.1']
  %s0 = inlined_call_operand.<no memory space> [shape: s32[1,1], index: 0, kind: input, shape index: {}]
  %s1 = inlined_call_operand.hbm [shape: f32[1,1024], index: 1, kind: output, shape index: {}]
  %s2 = sld [smem:[#allocation0]]
  $region14: #{tpu_custom_call.1} parent=0
    _
  %s4 = ssub.s32 1, %s2
  %s5 = scalar_select 0, %s4, %s2
  %v6 = vstv %s0
  %7 = vst [vmem:[#allocation2] sm:$0x1] %v6
  $region1: #{tpu_custom_call.1} parent=0
    #allocation3 [shape = 'u8[4096]{0}', space=vmem, size = 0x1000, scoped, tag = 'output window, operand 0, single buffered']
    #allocation4 [shape = 's32[1]{0}', space=sflag, size = 0x4, scoped, tag = 'scoped memory for tpu_custom_call.1']
    %8 = vsyncpa [#allocation4], 0
    // Predicated region
    $region2: #{tpu_custom_call.1} parent=1 // pred_check
      _
    $region3: #{tpu_custom_call.1} parent=1 // pred_check_branch
      %10 = sbr.rel (0) target = $region5
    $region4: #{tpu_custom_call.1} parent=1 // pred_region
      _
    $region5: #{tpu_custom_call.1} parent=1 // pred_fallthru
      _
    %v11 = vlaneseq
    %v12 = vshrl.u32 %v11, 7
    %v13 = vstv 0
    %v14 = vadd.s32 %v12, %v13
    %v15 = vlaneseq
    %v16 = vand.u32 %v15, 127
    %v17 = vadd.s32 %v16, 128
    %v18 = vadd.s32 %v16, 256
    %v19 = vadd.s32 %v16, 384
    %v20 = vadd.s32 %v16, 512
    %v21 = vadd.s32 %v16, 640
    %v22 = vadd.s32 %v16, 768
    %v23 = vadd.s32 %v16, 896
    %v24 = vmul.u32 %v14, 1024
    %v25 = vadd.s32 %v24, %v16
    %v26 = vadd.s32 %v24, %v17
    %v27 = vadd.s32 %v24, %v18
    %v28 = vadd.s32 %v24, %v19
    %v29 = vadd.s32 %v24, %v20
    %v30 = vadd.s32 %v24, %v21
    %v31 = vadd.s32 %v24, %v22
    %v32 = vadd.s32 %v24, %v23
    %v33 = vld [vmem:[#allocation2] sm:$0x1]
    %v34 = vmul.u32 %v25, 2
    %v35 = vmul.u32 %v26, 2
    %v36 = vmul.u32 %v27, 2
    %v37 = vmul.u32 %v28, 2
    %v38 = vmul.u32 %v29, 2
    %v39 = vmul.u32 %v30, 2
    %v40 = vmul.u32 %v31, 2
    %v41 = vmul.u32 %v32, 2
    %v42 = vmul.u32 %v33, 2654435769
    %43 = vset.pattern.permute.xlu0 0
    %44 = vperm.xlu0 %43, %v42
    %v45 = vpop.permute.xlu0 %44
    %v46 = vlaneseq
    %v47 = vshrl.u32 %v46, 7
    %v48 = vsub.s32 0, %v47
    %v49 = vrot.slane %v45, %v48
    %v50 = vadd.s32 %v34, %v49
    %v51 = vadd.s32 %v35, %v49
    %v52 = vadd.s32 %v36, %v49
    %v53 = vadd.s32 %v37, %v49
    %v54 = vadd.s32 %v38, %v49
    %v55 = vadd.s32 %v39, %v49
    %v56 = vadd.s32 %v40, %v49
    %v57 = vadd.s32 %v41, %v49
    %v58 = vadd.s32 %v50, 1779033703
    %v59 = vadd.s32 %v51, 1779033703
    %v60 = vadd.s32 %v52, 1779033703
    %v61 = vadd.s32 %v53, 1779033703
    %v62 = vadd.s32 %v54, 1779033703
    %v63 = vadd.s32 %v55, 1779033703
    %v64 = vadd.s32 %v56, 1779033703
    %v65 = vadd.s32 %v57, 1779033703
    %v66 = vshrl.u32 %v58, 16
    %v67 = vshrl.u32 %v59, 16
    %v68 = vshrl.u32 %v60, 16
    %v69 = vshrl.u32 %v61, 16
    %v70 = vshrl.u32 %v62, 16
    %v71 = vshrl.u32 %v63, 16
    %v72 = vshrl.u32 %v64, 16
    %v73 = vshrl.u32 %v65, 16
    %v74 = vxor.u32 %v58, %v66
    %v75 = vxor.u32 %v59, %v67
    %v76 = vxor.u32 %v60, %v68
    %v77 = vxor.u32 %v61, %v69
    %v78 = vxor.u32 %v62, %v70
    %v79 = vxor.u32 %v63, %v71
    %v80 = vxor.u32 %v64, %v72
    %v81 = vxor.u32 %v65, %v73
    %v82 = vmul.u32 %v74, 2146121005
    %v83 = vmul.u32 %v75, 2146121005
    %v84 = vmul.u32 %v76, 2146121005
    %v85 = vmul.u32 %v77, 2146121005
    %v86 = vmul.u32 %v78, 2146121005
    %v87 = vmul.u32 %v79, 2146121005
    %v88 = vmul.u32 %v80, 2146121005
    %v89 = vmul.u32 %v81, 2146121005
    %v90 = vshrl.u32 %v82, 15
    %v91 = vshrl.u32 %v83, 15
    %v92 = vshrl.u32 %v84, 15
    %v93 = vshrl.u32 %v85, 15
    %v94 = vshrl.u32 %v86, 15
    %v95 = vshrl.u32 %v87, 15
    %v96 = vshrl.u32 %v88, 15
    %v97 = vshrl.u32 %v89, 15
    %v98 = vxor.u32 %v82, %v90
    %v99 = vxor.u32 %v83, %v91
    %v100 = vxor.u32 %v84, %v92
    %v101 = vxor.u32 %v85, %v93
    %v102 = vxor.u32 %v86, %v94
    %v103 = vxor.u32 %v87, %v95
    %v104 = vxor.u32 %v88, %v96
    %v105 = vxor.u32 %v89, %v97
    %v106 = vmul.u32 %v98, 2221713035
    %v107 = vmul.u32 %v99, 2221713035
    %v108 = vmul.u32 %v100, 2221713035
    %v109 = vmul.u32 %v101, 2221713035
    %v110 = vmul.u32 %v102, 2221713035
    %v111 = vmul.u32 %v103, 2221713035
    %v112 = vmul.u32 %v104, 2221713035
    %v113 = vmul.u32 %v105, 2221713035
    %v114 = vshrl.u32 %v106, 16
    %v115 = vshrl.u32 %v107, 16
    %v116 = vshrl.u32 %v108, 16
    %v117 = vshrl.u32 %v109, 16
    %v118 = vshrl.u32 %v110, 16
    %v119 = vshrl.u32 %v111, 16
    %v120 = vshrl.u32 %v112, 16
    %v121 = vshrl.u32 %v113, 16
    %v122 = vxor.u32 %v106, %v114
    %v123 = vxor.u32 %v107, %v115
    %v124 = vxor.u32 %v108, %v116
    %v125 = vxor.u32 %v109, %v117
    %v126 = vxor.u32 %v110, %v118
    %v127 = vxor.u32 %v111, %v119
    %v128 = vxor.u32 %v112, %v120
    %v129 = vxor.u32 %v113, %v121
    %v130 = vadd.s32 %v58, 1
    %v131 = vadd.s32 %v59, 1
    %v132 = vadd.s32 %v60, 1
    %v133 = vadd.s32 %v61, 1
    %v134 = vadd.s32 %v62, 1
    %v135 = vadd.s32 %v63, 1
    %v136 = vadd.s32 %v64, 1
    %v137 = vadd.s32 %v65, 1
    %v138 = vshrl.u32 %v130, 16
    %v139 = vshrl.u32 %v131, 16
    %v140 = vshrl.u32 %v132, 16
    %v141 = vshrl.u32 %v133, 16
    %v142 = vshrl.u32 %v134, 16
    %v143 = vshrl.u32 %v135, 16
    %v144 = vshrl.u32 %v136, 16
    %v145 = vshrl.u32 %v137, 16
    %v146 = vxor.u32 %v130, %v138
    %v147 = vxor.u32 %v131, %v139
    %v148 = vxor.u32 %v132, %v140
    %v149 = vxor.u32 %v133, %v141
    %v150 = vxor.u32 %v134, %v142
    %v151 = vxor.u32 %v135, %v143
    %v152 = vxor.u32 %v136, %v144
    %v153 = vxor.u32 %v137, %v145
    %v154 = vmul.u32 %v146, 2146121005
    %v155 = vmul.u32 %v147, 2146121005
    %v156 = vmul.u32 %v148, 2146121005
    %v157 = vmul.u32 %v149, 2146121005
    %v158 = vmul.u32 %v150, 2146121005
    %v159 = vmul.u32 %v151, 2146121005
    %v160 = vmul.u32 %v152, 2146121005
    %v161 = vmul.u32 %v153, 2146121005
    %v162 = vshrl.u32 %v154, 15
    %v163 = vshrl.u32 %v155, 15
    %v164 = vshrl.u32 %v156, 15
    %v165 = vshrl.u32 %v157, 15
    %v166 = vshrl.u32 %v158, 15
    %v167 = vshrl.u32 %v159, 15
    %v168 = vshrl.u32 %v160, 15
    %v169 = vshrl.u32 %v161, 15
    %v170 = vxor.u32 %v154, %v162
    %v171 = vxor.u32 %v155, %v163
    %v172 = vxor.u32 %v156, %v164
    %v173 = vxor.u32 %v157, %v165
    %v174 = vxor.u32 %v158, %v166
    %v175 = vxor.u32 %v159, %v167
    %v176 = vxor.u32 %v160, %v168
    %v177 = vxor.u32 %v161, %v169
    %v178 = vmul.u32 %v170, 2221713035
    %v179 = vmul.u32 %v171, 2221713035
    %v180 = vmul.u32 %v172, 2221713035
    %v181 = vmul.u32 %v173, 2221713035
    %v182 = vmul.u32 %v174, 2221713035
    %v183 = vmul.u32 %v175, 2221713035
    %v184 = vmul.u32 %v176, 2221713035
    %v185 = vmul.u32 %v177, 2221713035
    %v186 = vshrl.u32 %v178, 16
    %v187 = vshrl.u32 %v179, 16
    %v188 = vshrl.u32 %v180, 16
    %v189 = vshrl.u32 %v181, 16
    %v190 = vshrl.u32 %v182, 16
    %v191 = vshrl.u32 %v183, 16
    %v192 = vshrl.u32 %v184, 16
    %v193 = vshrl.u32 %v185, 16
    %v194 = vxor.u32 %v178, %v186
    %v195 = vxor.u32 %v179, %v187
    %v196 = vxor.u32 %v180, %v188
    %v197 = vxor.u32 %v181, %v189
    %v198 = vxor.u32 %v182, %v190
    %v199 = vxor.u32 %v183, %v191
    %v200 = vxor.u32 %v184, %v192
    %v201 = vxor.u32 %v185, %v193
    %v202 = vshrl.u32 %v122, 8
    %v203 = vshrl.u32 %v123, 8
    %v204 = vshrl.u32 %v124, 8
    %v205 = vshrl.u32 %v125, 8
    %v206 = vshrl.u32 %v126, 8
    %v207 = vshrl.u32 %v127, 8
    %v208 = vshrl.u32 %v128, 8
    %v209 = vshrl.u32 %v129, 8
    %v210 = vshrl.u32 %v202, 16
    %v211 = vand.u32 %v202, 65535
    %v212 = vcvt.s32.f32 %v210
    %v213 = vmul.f32 %v212, 65536.0
    %v214 = vcvt.s32.f32 %v211
    %v215 = vadd.f32 %v213, %v214
    %v216 = vshrl.u32 %v203, 16
    %v217 = vand.u32 %v203, 65535
    %v218 = vcvt.s32.f32 %v216
    %v219 = vmul.f32 %v218, 65536.0
    %v220 = vcvt.s32.f32 %v217
    %v221 = vadd.f32 %v219, %v220
    %v222 = vshrl.u32 %v204, 16
    %v223 = vand.u32 %v204, 65535
    %v224 = vcvt.s32.f32 %v222
    %v225 = vmul.f32 %v224, 65536.0
    %v226 = vcvt.s32.f32 %v223
    %v227 = vadd.f32 %v225, %v226
    %v228 = vshrl.u32 %v205, 16
    %v229 = vand.u32 %v205, 65535
    %v230 = vcvt.s32.f32 %v228
    %v231 = vmul.f32 %v230, 65536.0
    %v232 = vcvt.s32.f32 %v229
    %v233 = vadd.f32 %v231, %v232
    %v234 = vshrl.u32 %v206, 16
    %v235 = vand.u32 %v206, 65535
    %v236 = vcvt.s32.f32 %v234
    %v237 = vmul.f32 %v236, 65536.0
    %v238 = vcvt.s32.f32 %v235
    %v239 = vadd.f32 %v237, %v238
    %v240 = vshrl.u32 %v207, 16
    %v241 = vand.u32 %v207, 65535
    %v242 = vcvt.s32.f32 %v240
    %v243 = vmul.f32 %v242, 65536.0
    %v244 = vcvt.s32.f32 %v241
    %v245 = vadd.f32 %v243, %v244
    %v246 = vshrl.u32 %v208, 16
    %v247 = vand.u32 %v208, 65535
    %v248 = vcvt.s32.f32 %v246
    %v249 = vmul.f32 %v248, 65536.0
    %v250 = vcvt.s32.f32 %v247
    %v251 = vadd.f32 %v249, %v250
    %v252 = vshrl.u32 %v209, 16
    %v253 = vand.u32 %v209, 65535
    %v254 = vcvt.s32.f32 %v252
    %v255 = vmul.f32 %v254, 65536.0
    %v256 = vcvt.s32.f32 %v253
    %v257 = vadd.f32 %v255, %v256
    %v258 = vmul.f32 %v215, 8.5149495e-08
    %v259 = vmul.f32 %v221, 8.5149495e-08
    %v260 = vmul.f32 %v227, 8.5149495e-08
    %v261 = vmul.f32 %v233, 8.5149495e-08
    %v262 = vmul.f32 %v239, 8.5149495e-08
    %v263 = vmul.f32 %v245, 8.5149495e-08
    %v264 = vmul.f32 %v251, 8.5149495e-08
    %v265 = vmul.f32 %v257, 8.5149495e-08
    %v266 = vshrl.u32 %v194, 8
    %v267 = vshrl.u32 %v195, 8
    %v268 = vshrl.u32 %v196, 8
    %v269 = vshrl.u32 %v197, 8
    %v270 = vshrl.u32 %v198, 8
    %v271 = vshrl.u32 %v199, 8
    %v272 = vshrl.u32 %v200, 8
    %v273 = vshrl.u32 %v201, 8
    %vm274 = vcmp.ge.u32.totalorder %v266, 5033165
    %vm275 = vcmp.ge.u32.totalorder %v267, 5033165
    %vm276 = vcmp.ge.u32.totalorder %v268, 5033165
    %vm277 = vcmp.ge.u32.totalorder %v269, 5033165
    %vm278 = vcmp.ge.u32.totalorder %v270, 5033165
    %vm279 = vcmp.ge.u32.totalorder %v271, 5033165
    %vm280 = vcmp.ge.u32.totalorder %v272, 5033165
    %vm281 = vcmp.ge.u32.totalorder %v273, 5033165
    %v282 = vsel %vm274, %v258, 0.0
    %v283 = vsel %vm275, %v259, 0.0
    %v284 = vsel %vm276, %v260, 0.0
    %v285 = vsel %vm277, %v261, 0.0
    %v286 = vsel %vm278, %v262, 0.0
    %v287 = vsel %vm279, %v263, 0.0
    %v288 = vsel %vm280, %v264, 0.0
    %v289 = vsel %vm281, %v265, 0.0
    %v298 = vcombine.low %v282, %v283
    %v299 = vcombine.low %v284, %v285
    %v300 = vcombine.low %v286, %v287
    %v301 = vcombine.low %v288, %v289
    %v303 = vunpack.c.l.s4 1966171168
    %v304 = vunpack.c.0.s8 %v303
    %v305 = vlaneseq
    %v306 = vshrl.u32 %v305, 7
    %v307 = vsub.s32 %v304, %v306
    %v308 = vrot.slane %v298, %v307
    %v310 = vunpack.c.l.s4 1966171168
    %v311 = vunpack.c.0.s8 %v310
    %v312 = vlaneseq
    %v313 = vshrl.u32 %v312, 7
    %v314 = vsub.s32 %v311, %v313
    %v315 = vrot.slane %v299, %v314
    %v317 = vunpack.c.l.s4 1966171168
    %v318 = vunpack.c.0.s8 %v317
    %v319 = vlaneseq
    %v320 = vshrl.u32 %v319, 7
    %v321 = vsub.s32 %v318, %v320
    %v322 = vrot.slane %v300, %v321
    %v324 = vunpack.c.l.s4 1966171168
    %v325 = vunpack.c.0.s8 %v324
    %v326 = vlaneseq
    %v327 = vshrl.u32 %v326, 7
    %v328 = vsub.s32 %v325, %v327
    %v329 = vrot.slane %v301, %v328
    %v330 = vcombine.low %v308, %v315
    %v331 = vcombine.low %v322, %v329
    %v333 = vunpack.c.l.s4 1966171168
    %v334 = vunpack.c.0.s8 %v333
    %v335 = vlaneseq
    %v336 = vshrl.u32 %v335, 7
    %v337 = vsub.s32 %v334, %v336
    %v338 = vrot.slane %v330, %v337
    %v340 = vunpack.c.l.s4 1966171168
    %v341 = vunpack.c.0.s8 %v340
    %v342 = vlaneseq
    %v343 = vshrl.u32 %v342, 7
    %v344 = vsub.s32 %v341, %v343
    %v345 = vrot.slane %v331, %v344
    %v346 = vcombine.low %v338, %v345
    %348 = vst [vmem:[#allocation3] sm:$0xff] %v346
    // Predicated region
    $region6: #{tpu_custom_call.1} parent=1 // pred_check
      _
    $region7: #{tpu_custom_call.1} parent=1 // pred_check_branch
      %350 = sbr.rel (0) target = $region9
    $region8: #{tpu_custom_call.1} parent=1 // pred_region
      %s352 = ssub.s32 128, 128
      %353 = vsyncadd [#allocation4], %s352
      %s355 = sshll.u32 [#allocation3], 4
      %s356 = int_to_ptr.vmem [resolvable:$true] %s355
      %358 = dma.vmem_to_hbm [thread:$0]  %s356, 128, %s1, [#allocation4]
    $region9: #{tpu_custom_call.1} parent=1 // pred_fallthru
      _
    // Predicated region
    $region10: #{tpu_custom_call.1} parent=1 // pred_check
      _
    $region11: #{tpu_custom_call.1} parent=1 // pred_check_branch
      %360 = sbr.rel (0) target = $region13
    $region12: #{tpu_custom_call.1} parent=1 // pred_region
      %361 = dma.done [#allocation4], 128
    $region13: #{tpu_custom_call.1} parent=1 // pred_fallthru
      _
    %362 = vsyncpa [#allocation4], 1

</llo_original>
